<compile_context>
chip_gen: v7x
topology: tpu7x:2x2x1
jax: 0.10.0
libtpu: 0.0.40
codegen_flags: <defaults>
</compile_context>

<pallas_src>
import jax
import jax.numpy as jnp
from jax.experimental import pallas as pl
from jax.experimental.pallas import tpu as pltpu


def double_vqvae_kernel(emb_ref, mask_ref, wenc_ref, cb_ref, cbt_ref, cbsq_ref,
                        wdec_ref, seg_ref, segt_ref, wcls_ref, bcls_ref,
                        zt_ref, idx_ref, recon_ref, prob_ref):
    emb = emb_ref[...]            # [BP, S, D]  float32
    mask = mask_ref[...]          # [BP, S]     float32 (1 = valid)

    # ---------------- Encoder: masked mean-pool + linear ----------------
    m3 = mask[:, :, None]                                            # [BP, S, 1]
    denom = jnp.maximum(jnp.sum(mask, axis=1, keepdims=True), 1.0)   # [BP, 1]
    pooled = jnp.sum(emb * m3, axis=1) / denom                       # [BP, D]
    z_e = jnp.dot(pooled, wenc_ref[...],
                  preferred_element_type=jnp.float32)                # [BP, Dz]

    # ---------------- Vector quantization (nearest codebook entry) ------
    # codebook transpose + squared norms are precomputed in the wrapper.
    K = cbt_ref.shape[1]
    z_sq = jnp.sum(z_e * z_e, axis=1, keepdims=True)                 # [BP, 1]
    d = (z_sq
         - 2.0 * jnp.dot(z_e, cbt_ref[...],
                         preferred_element_type=jnp.float32)
         + cbsq_ref[...])                                            # [BP, K]
    min_d = jnp.min(d, axis=1, keepdims=True)                        # [BP, 1]
    iota_k = jax.lax.broadcasted_iota(jnp.int32, d.shape, 1)
    idx = jnp.min(jnp.where(d <= min_d, iota_k, K), axis=1, keepdims=True)
    onehot = (iota_k == idx).astype(jnp.float32)                     # [BP, K]
    z_q = jnp.dot(onehot, cb_ref[...],
                  preferred_element_type=jnp.float32)                # [BP, Dz]

    # z_t: forward value of the straight-through latent == z_q
    zt_ref[...] = z_q
    # lane-dense (unmasked) store of the indices; wrapper keeps column 0.
    idx_ref[...] = jnp.broadcast_to(idx, idx_ref.shape).astype(jnp.int32)

    # ---------------- Decoder: one matmul + fused per-position softmax --
    logits = jnp.dot(z_q, wdec_ref[...],
                     preferred_element_type=jnp.float32)             # [BP, S*V]
    m = jnp.max(logits, axis=-1, keepdims=True)                      # global row max
    e = jnp.exp(logits - m)                                          # [BP, S*V]
    # per-position sums (and broadcast back) via tiny MXU matmuls — no reshape
    ssum = jnp.dot(e, seg_ref[...],
                   preferred_element_type=jnp.float32)               # [BP, S]
    denom_full = jnp.dot(ssum, segt_ref[...],
                         preferred_element_type=jnp.float32)         # [BP, S*V]
    recon_ref[...] = e / denom_full

    # ---------------- Classifier on z_t (lane-padded to 128 labels) -----
    cls_logits = (jnp.dot(z_q, wcls_ref[...],
                          preferred_element_type=jnp.float32)
                  + bcls_ref[...])                                   # [BP, LP]
    cm = jnp.max(cls_logits, axis=-1, keepdims=True)
    ce = jnp.exp(cls_logits - cm)
    prob_ref[...] = ce / jnp.sum(ce, axis=-1, keepdims=True)


def model_forward(input_idx, x_pad_mask, params):
    """input_idx: [B, S] int32, x_pad_mask: [B, S] (1 = valid) or None."""
    emb_table = params["emb_table"]                   # [V, D]
    B, S = input_idx.shape
    if x_pad_mask is None:
        x_pad_mask = jnp.ones((B, S), jnp.float32)

    # TODO(synk): at real (D, S) sizes fuse this gather into the kernel via
    # PrefetchScalarGridSpec + pl.Element row-gather to avoid an HBM round-trip.
    emb = jnp.take(emb_table, input_idx, axis=0).astype(jnp.float32)  # [B,S,D]
    mask = x_pad_mask.astype(jnp.float32)

    D = emb_table.shape[1]
    Dz = params["w_enc"].shape[1]
    V = params["w_dec"].shape[2]
    L = params["w_cls"].shape[1]

    # --- pad batch to a full sublane tile (multiple of 8) -----------------
    BP = ((B + 7) // 8) * 8
    pad_b = BP - B
    emb_p = jnp.pad(emb, ((0, pad_b), (0, 0), (0, 0)))
    mask_p = jnp.pad(mask, ((0, pad_b), (0, 0)))      # padded rows: mask = 0

    # --- codebook layout work hoisted out of the kernel --------------------
    cb = params["codebook"].astype(jnp.float32)       # [K, Dz]
    cb_t = cb.T                                       # [Dz, K]
    cb_sq = jnp.sum(cb * cb, axis=1)[None, :]         # [1, K]

    # --- decoder weight as a single [Dz, S*V] matmul operand (layout only) -
    w_dec = params["w_dec"].astype(jnp.float32)       # [S, Dz, V]
    wdec2d = jnp.transpose(w_dec, (1, 0, 2)).reshape(Dz, S * V)

    # --- segment-indicator matrices for the fused per-position softmax -----
    seg = jnp.repeat(jnp.eye(S, dtype=jnp.float32), V, axis=0)   # [S*V, S]
    seg_t = seg.T                                                # [S, S*V]

    # --- classifier weight/bias padded to lane-dense 128 columns -----------
    LP = 128
    wcls_p = jnp.zeros((Dz, LP), jnp.float32).at[:, :L].set(
        params["w_cls"].astype(jnp.float32))
    bcls_p = jnp.full((1, LP), -1e30, jnp.float32).at[:, :L].set(
        params["b_cls"].reshape(1, L).astype(jnp.float32))

    vmem = pl.BlockSpec(memory_space=pltpu.MemorySpace.VMEM)
    z_t, idx_out, recon2d, prob_p = pl.pallas_call(
        double_vqvae_kernel,
        out_shape=(
            jax.ShapeDtypeStruct((BP, Dz), jnp.float32),       # z_t
            jax.ShapeDtypeStruct((BP, 128), jnp.int32),        # codebook indices
            jax.ShapeDtypeStruct((BP, S * V), jnp.float32),    # recon probs (flat)
            jax.ShapeDtypeStruct((BP, LP), jnp.float32),       # classifier probs
        ),
        in_specs=[vmem] * 11,
        out_specs=(vmem, vmem, vmem, vmem),
    )(emb_p, mask_p, params["w_enc"].astype(jnp.float32),
      cb, cb_t, cb_sq, wdec2d, seg, seg_t, wcls_p, bcls_p)

    return {
        "z_t": z_t[:B],
        "encoding_indices": idx_out[:B, :1],
        "recon_result": recon2d[:B].reshape(B, S, V),
        "prob": prob_p[:B, :L],
    }


def init_params(key, vocab=32, d=32, dz=32, k=16, s=8, labels=4):
    ks = jax.random.split(key, 6)
    return {
        "emb_table": 0.1 * jax.random.normal(ks[0], (vocab, d), jnp.float32),
        "w_enc":     0.1 * jax.random.normal(ks[1], (d, dz), jnp.float32),
        "codebook":        jax.random.normal(ks[2], (k, dz), jnp.float32),
        "w_dec":     0.1 * jax.random.normal(ks[3], (s, dz, vocab), jnp.float32),
        "w_cls":     0.1 * jax.random.normal(ks[4], (dz, labels), jnp.float32),
        "b_cls":     jnp.zeros((1, labels), jnp.float32),
    }


if __name__ == "__main__":
    B, S, V, D, DZ, K, L = 2, 8, 32, 32, 32, 16, 4
    key = jax.random.PRNGKey(0)
    k_params, k_idx = jax.random.split(key)

    params = init_params(k_params, vocab=V, d=D, dz=DZ, k=K, s=S, labels=L)
    input_idx = jax.random.randint(k_idx, (B, S), 0, V, dtype=jnp.int32)
    # pad mask: first example fully valid, second example padded after 5 tokens
    pos = jnp.arange(S)[None, :]
    lengths = jnp.array([[S], [5]], jnp.int32)
    x_pad_mask = (pos < lengths).astype(jnp.float32)

    result = jax.jit(model_forward)(input_idx, x_pad_mask, params)
    jax.block_until_ready(result)

    assert result["z_t"].shape == (B, DZ)
    assert result["encoding_indices"].shape == (B, 1)
    assert result["recon_result"].shape == (B, S, V)
    assert result["prob"].shape == (B, L)
    # probabilities should sum to 1
    assert jnp.allclose(jnp.sum(result["prob"], axis=-1), 1.0, atol=1e-4)
    assert jnp.allclose(jnp.sum(result["recon_result"], axis=-1), 1.0, atol=1e-4)
    # quantized latent must equal the selected codebook rows exactly
    sel = params["codebook"][result["encoding_indices"][:, 0]]
    assert jnp.allclose(result["z_t"], sel, atol=1e-5)

    print("KERNEL_OK")
</pallas_src>

<mosaic_0001>
module attributes {stable_mosaic.version = 11 : i64} {
  func.func @double_vqvae_kernel(%arg0: memref<8x8x32xf32, #tpu.memory_space<vmem>>, %arg1: memref<8x8xf32, #tpu.memory_space<vmem>>, %arg2: memref<32x32xf32, #tpu.memory_space<vmem>>, %arg3: memref<16x32xf32, #tpu.memory_space<vmem>>, %arg4: memref<32x16xf32, #tpu.memory_space<vmem>>, %arg5: memref<1x16xf32, #tpu.memory_space<vmem>>, %arg6: memref<32x256xf32, #tpu.memory_space<vmem>>, %arg7: memref<256x8xf32, #tpu.memory_space<vmem>>, %arg8: memref<8x256xf32, #tpu.memory_space<vmem>>, %arg9: memref<32x128xf32, #tpu.memory_space<vmem>>, %arg10: memref<1x128xf32, #tpu.memory_space<vmem>>, %arg11: memref<8x32xf32, #tpu.memory_space<vmem>>, %arg12: memref<8x128xi32, #tpu.memory_space<vmem>>, %arg13: memref<8x256xf32, #tpu.memory_space<vmem>>, %arg14: memref<8x128xf32, #tpu.memory_space<vmem>>) attributes {dimension_semantics = [], scalar_prefetch = 0 : i64, scratch_operands = 0 : i64, tpu.core_type = #tpu.core_type<tc>} {
    %c0 = arith.constant 0 : index
    %c0_0 = arith.constant 0 : index
    %c0_1 = arith.constant 0 : index
    %0 = vector.load %arg0[%c0, %c0_0, %c0_1] : memref<8x8x32xf32, #tpu.memory_space<vmem>>, vector<8x8x32xf32>
    %c0_2 = arith.constant 0 : index
    %c0_3 = arith.constant 0 : index
    %1 = vector.load %arg1[%c0_2, %c0_3] : memref<8x8xf32, #tpu.memory_space<vmem>>, vector<8x8xf32>
    %2 = vector.shape_cast %1 : vector<8x8xf32> to vector<8x8x1xf32>
    %cst = arith.constant dense<0.000000e+00> : vector<8xf32>
    %3 = vector.multi_reduction <add>, %1, %cst [1] : vector<8x8xf32> to vector<8xf32>
    %4 = vector.shape_cast %3 : vector<8xf32> to vector<8x1xf32>
    %cst_4 = arith.constant 1.000000e+00 : f32
    %5 = vector.broadcast %cst_4 : f32 to vector<8x1xf32>
    %6 = arith.maximumf %4, %5 : vector<8x1xf32>
    %7 = vector.broadcast %2 : vector<8x8x1xf32> to vector<8x8x32xf32>
    %8 = arith.mulf %0, %7 : vector<8x8x32xf32>
    %cst_5 = arith.constant dense<0.000000e+00> : vector<8x32xf32>
    %9 = vector.multi_reduction <add>, %8, %cst_5 [1] : vector<8x8x32xf32> to vector<8x32xf32>
    %10 = vector.broadcast %6 : vector<8x1xf32> to vector<8x32xf32>
    %11 = arith.divf %9, %10 : vector<8x32xf32>
    %c0_6 = arith.constant 0 : index
    %c0_7 = arith.constant 0 : index
    %12 = vector.load %arg2[%c0_6, %c0_7] : memref<32x32xf32, #tpu.memory_space<vmem>>, vector<32x32xf32>
    %cst_8 = arith.constant dense<0.000000e+00> : vector<8x32xf32>
    %13 = tpu.matmul %11, %12, %cst_8 {dimension_numbers = #tpu.dot_dimension_numbers<[1], [0], [0], [1], [0, 0, 1, 1], [], []>} : vector<8x32xf32>, vector<32x32xf32>, vector<8x32xf32> -> vector<8x32xf32>
    %14 = arith.mulf %13, %13 : vector<8x32xf32>
    %cst_9 = arith.constant dense<0.000000e+00> : vector<8xf32>
    %15 = vector.multi_reduction <add>, %14, %cst_9 [1] : vector<8x32xf32> to vector<8xf32>
    %16 = vector.shape_cast %15 : vector<8xf32> to vector<8x1xf32>
    %c0_10 = arith.constant 0 : index
    %c0_11 = arith.constant 0 : index
    %17 = vector.load %arg4[%c0_10, %c0_11] : memref<32x16xf32, #tpu.memory_space<vmem>>, vector<32x16xf32>
    %cst_12 = arith.constant dense<0.000000e+00> : vector<8x16xf32>
    %18 = tpu.matmul %13, %17, %cst_12 {dimension_numbers = #tpu.dot_dimension_numbers<[1], [0], [0], [1], [0, 0, 1, 1], [], []>} : vector<8x32xf32>, vector<32x16xf32>, vector<8x16xf32> -> vector<8x16xf32>
    %cst_13 = arith.constant 2.000000e+00 : f32
    %19 = vector.broadcast %cst_13 : f32 to vector<8x16xf32>
    %20 = arith.mulf %19, %18 : vector<8x16xf32>
    %21 = vector.broadcast %16 : vector<8x1xf32> to vector<8x16xf32>
    %22 = arith.subf %21, %20 : vector<8x16xf32>
    %c0_14 = arith.constant 0 : index
    %c0_15 = arith.constant 0 : index
    %23 = vector.load %arg5[%c0_14, %c0_15] : memref<1x16xf32, #tpu.memory_space<vmem>>, vector<1x16xf32>
    %24 = vector.broadcast %23 : vector<1x16xf32> to vector<8x16xf32>
    %25 = arith.addf %22, %24 : vector<8x16xf32>
    %cst_16 = arith.constant dense<0x7F800000> : vector<8xf32>
    %26 = vector.multi_reduction <minimumf>, %25, %cst_16 [1] : vector<8x16xf32> to vector<8xf32>
    %27 = vector.shape_cast %26 : vector<8xf32> to vector<8x1xf32>
    %28 = tpu.iota {dimensions = array<i32: 1>} : vector<8x16xi32>
    %29 = vector.broadcast %27 : vector<8x1xf32> to vector<8x16xf32>
    %30 = arith.cmpf ole, %25, %29 : vector<8x16xf32>
    %c16_i32 = arith.constant 16 : i32
    %31 = vector.broadcast %c16_i32 : i32 to vector<8x16xi32>
    %32 = arith.select %30, %28, %31 : vector<8x16xi1>, vector<8x16xi32>
    %cst_17 = arith.constant dense<2147483647> : vector<8xi32>
    %33 = vector.multi_reduction <minsi>, %32, %cst_17 [1] : vector<8x16xi32> to vector<8xi32>
    %34 = vector.shape_cast %33 : vector<8xi32> to vector<8x1xi32>
    %35 = vector.broadcast %34 : vector<8x1xi32> to vector<8x16xi32>
    %36 = arith.cmpi eq, %28, %35 : vector<8x16xi32>
    %37 = arith.extui %36 : vector<8x16xi1> to vector<8x16xi32>
    %38 = arith.sitofp %37 : vector<8x16xi32> to vector<8x16xf32>
    %c0_18 = arith.constant 0 : index
    %c0_19 = arith.constant 0 : index
    %39 = vector.load %arg3[%c0_18, %c0_19] : memref<16x32xf32, #tpu.memory_space<vmem>>, vector<16x32xf32>
    %cst_20 = arith.constant dense<0.000000e+00> : vector<8x32xf32>
    %40 = tpu.matmul %38, %39, %cst_20 {dimension_numbers = #tpu.dot_dimension_numbers<[1], [0], [0], [1], [0, 0, 1, 1], [], []>} : vector<8x16xf32>, vector<16x32xf32>, vector<8x32xf32> -> vector<8x32xf32>
    %c0_21 = arith.constant 0 : index
    %c0_22 = arith.constant 0 : index
    %41 = vector.load %arg11[%c0_21, %c0_22] : memref<8x32xf32, #tpu.memory_space<vmem>>, vector<8x32xf32>
    tpu.vector_store %arg11[%c0_21, %c0_22], %40 {strides = array<i32>} : memref<8x32xf32, #tpu.memory_space<vmem>>, vector<8x32xf32>,
    %42 = vector.shape_cast %34 : vector<8x1xi32> to vector<8x1xi32>
    %43 = vector.broadcast %42 : vector<8x1xi32> to vector<8x128xi32>
    %c0_23 = arith.constant 0 : index
    %c0_24 = arith.constant 0 : index
    %44 = vector.load %arg12[%c0_23, %c0_24] : memref<8x128xi32, #tpu.memory_space<vmem>>, vector<8x128xi32>
    tpu.vector_store %arg12[%c0_23, %c0_24], %43 {strides = array<i32>} : memref<8x128xi32, #tpu.memory_space<vmem>>, vector<8x128xi32>,
    %c0_25 = arith.constant 0 : index
    %c0_26 = arith.constant 0 : index
    %45 = vector.load %arg6[%c0_25, %c0_26] : memref<32x256xf32, #tpu.memory_space<vmem>>, vector<32x256xf32>
    %cst_27 = arith.constant dense<0.000000e+00> : vector<8x256xf32>
    %46 = tpu.matmul %40, %45, %cst_27 {dimension_numbers = #tpu.dot_dimension_numbers<[1], [0], [0], [1], [0, 0, 1, 1], [], []>} : vector<8x32xf32>, vector<32x256xf32>, vector<8x256xf32> -> vector<8x256xf32>
    %cst_28 = arith.constant dense<0xFF800000> : vector<8xf32>
    %47 = vector.multi_reduction <maximumf>, %46, %cst_28 [1] : vector<8x256xf32> to vector<8xf32>
    %48 = vector.shape_cast %47 : vector<8xf32> to vector<8x1xf32>
    %49 = vector.broadcast %48 : vector<8x1xf32> to vector<8x256xf32>
    %50 = arith.subf %46, %49 : vector<8x256xf32>
    %51 = math.exp %50 : vector<8x256xf32>
    %c0_29 = arith.constant 0 : index
    %c0_30 = arith.constant 0 : index
    %52 = vector.load %arg7[%c0_29, %c0_30] : memref<256x8xf32, #tpu.memory_space<vmem>>, vector<256x8xf32>
    %cst_31 = arith.constant dense<0.000000e+00> : vector<8x8xf32>
    %53 = tpu.matmul %51, %52, %cst_31 {dimension_numbers = #tpu.dot_dimension_numbers<[1], [0], [0], [1], [0, 0, 1, 1], [], []>} : vector<8x256xf32>, vector<256x8xf32>, vector<8x8xf32> -> vector<8x8xf32>
    %c0_32 = arith.constant 0 : index
    %c0_33 = arith.constant 0 : index
    %54 = vector.load %arg8[%c0_32, %c0_33] : memref<8x256xf32, #tpu.memory_space<vmem>>, vector<8x256xf32>
    %cst_34 = arith.constant dense<0.000000e+00> : vector<8x256xf32>
    %55 = tpu.matmul %53, %54, %cst_34 {dimension_numbers = #tpu.dot_dimension_numbers<[1], [0], [0], [1], [0, 0, 1, 1], [], []>} : vector<8x8xf32>, vector<8x256xf32>, vector<8x256xf32> -> vector<8x256xf32>
    %56 = arith.divf %51, %55 : vector<8x256xf32>
    %c0_35 = arith.constant 0 : index
    %c0_36 = arith.constant 0 : index
    %57 = vector.load %arg13[%c0_35, %c0_36] : memref<8x256xf32, #tpu.memory_space<vmem>>, vector<8x256xf32>
    tpu.vector_store %arg13[%c0_35, %c0_36], %56 {strides = array<i32>} : memref<8x256xf32, #tpu.memory_space<vmem>>, vector<8x256xf32>,
    %c0_37 = arith.constant 0 : index
    %c0_38 = arith.constant 0 : index
    %58 = vector.load %arg9[%c0_37, %c0_38] : memref<32x128xf32, #tpu.memory_space<vmem>>, vector<32x128xf32>
    %cst_39 = arith.constant dense<0.000000e+00> : vector<8x128xf32>
    %59 = tpu.matmul %40, %58, %cst_39 {dimension_numbers = #tpu.dot_dimension_numbers<[1], [0], [0], [1], [0, 0, 1, 1], [], []>} : vector<8x32xf32>, vector<32x128xf32>, vector<8x128xf32> -> vector<8x128xf32>
    %c0_40 = arith.constant 0 : index
    %c0_41 = arith.constant 0 : index
    %60 = vector.load %arg10[%c0_40, %c0_41] : memref<1x128xf32, #tpu.memory_space<vmem>>, vector<1x128xf32>
    %61 = vector.broadcast %60 : vector<1x128xf32> to vector<8x128xf32>
    %62 = arith.addf %59, %61 : vector<8x128xf32>
    %cst_42 = arith.constant dense<0xFF800000> : vector<8xf32>
    %63 = vector.multi_reduction <maximumf>, %62, %cst_42 [1] : vector<8x128xf32> to vector<8xf32>
    %64 = vector.shape_cast %63 : vector<8xf32> to vector<8x1xf32>
    %65 = vector.broadcast %64 : vector<8x1xf32> to vector<8x128xf32>
    %66 = arith.subf %62, %65 : vector<8x128xf32>
    %67 = math.exp %66 : vector<8x128xf32>
    %cst_43 = arith.constant dense<0.000000e+00> : vector<8xf32>
    %68 = vector.multi_reduction <add>, %67, %cst_43 [1] : vector<8x128xf32> to vector<8xf32>
    %69 = vector.shape_cast %68 : vector<8xf32> to vector<8x1xf32>
    %70 = vector.broadcast %69 : vector<8x1xf32> to vector<8x128xf32>
    %71 = arith.divf %67, %70 : vector<8x128xf32>
    %c0_44 = arith.constant 0 : index
    %c0_45 = arith.constant 0 : index
    %72 = vector.load %arg14[%c0_44, %c0_45] : memref<8x128xf32, #tpu.memory_space<vmem>>, vector<8x128xf32>
    tpu.vector_store %arg14[%c0_44, %c0_45], %71 {strides = array<i32>} : memref<8x128xf32, #tpu.memory_space<vmem>>, vector<8x128xf32>,
    return
  }
}

</mosaic_0001>

<llo_original>
// kernel: model_forward.1
$region0: #{model_forward.1}
  #allocation0 [shape = 'u32[]', space=smem, size = 0x4, offset = 0x4, fixed_abs, tag = 'smem constant byte address 0x4 - core index']
  #allocation1 [shape = 'u32[144,128]{1,0:T(1,128)}', space=vmem, size = 0x12000, scoped, tag = 'internal scratch']
  %s0 = inlined_call_operand.vmem [shape: f32[8,8,32], index: 0, kind: input, shape index: {}]
  %s1 = inlined_call_operand.vmem [shape: f32[8,8], index: 1, kind: input, shape index: {}]
  %s2 = inlined_call_operand.vmem [shape: f32[32,32], index: 2, kind: input, shape index: {}]
  %s3 = inlined_call_operand.vmem [shape: f32[16,32], index: 3, kind: input, shape index: {}]
  %s4 = inlined_call_operand.vmem [shape: f32[32,16], index: 4, kind: input, shape index: {}]
  %s5 = inlined_call_operand.vmem [shape: f32[1,16], index: 5, kind: input, shape index: {}]
  %s6 = inlined_call_operand.vmem [shape: f32[32,256], index: 6, kind: input, shape index: {}]
  %s7 = inlined_call_operand.vmem [shape: f32[256,8], index: 7, kind: input, shape index: {}]
  %s8 = inlined_call_operand.vmem [shape: f32[8,256], index: 8, kind: input, shape index: {}]
  %s9 = inlined_call_operand.vmem [shape: f32[32,128], index: 9, kind: input, shape index: {}]
  %s10 = inlined_call_operand.vmem [shape: f32[1,128], index: 10, kind: input, shape index: {}]
  %s11 = inlined_call_operand.vmem [shape: f32[8,32], index: 11, kind: output, shape index: {0}]
  %s12 = inlined_call_operand.vmem [shape: s32[8,128], index: 12, kind: output, shape index: {1}]
  %s13 = inlined_call_operand.vmem [shape: f32[8,256], index: 13, kind: output, shape index: {2}]
  %s14 = inlined_call_operand.vmem [shape: f32[8,128], index: 14, kind: output, shape index: {3}]
  %15 = xla_tuple %s11, %s12, %s13, %s14
  %s16 = sld [smem:[#allocation0]]
  $region78: #{model_forward.1} parent=0
    _
  %s18 = ssub.s32 1, %s16
  %s19 = scalar_select 0, %s18, %s16
  // Predicated region
  $region2: #{model_forward.1} parent=0 // pred_check
    _
  $region3: #{model_forward.1} parent=0 // pred_check_branch
    %21 = sbr.rel (0) target = $region5
  $region4: #{model_forward.1} parent=0 // pred_region
    _
  $region5: #{model_forward.1} parent=0 // pred_fallthru
    _
  // Predicated region
  $region6: #{model_forward.1} parent=0 // pred_check
    _
  $region7: #{model_forward.1} parent=0 // pred_check_branch
    %23 = sbr.rel (0) target = $region9
  $region8: #{model_forward.1} parent=0 // pred_region
    _
  $region9: #{model_forward.1} parent=0 // pred_fallthru
    _
  // Predicated region
  $region10: #{model_forward.1} parent=0 // pred_check
    _
  $region11: #{model_forward.1} parent=0 // pred_check_branch
    %25 = sbr.rel (0) target = $region13
  $region12: #{model_forward.1} parent=0 // pred_region
    _
  $region13: #{model_forward.1} parent=0 // pred_fallthru
    _
  // Predicated region
  $region14: #{model_forward.1} parent=0 // pred_check
    _
  $region15: #{model_forward.1} parent=0 // pred_check_branch
    %27 = sbr.rel (0) target = $region17
  $region16: #{model_forward.1} parent=0 // pred_region
    _
  $region17: #{model_forward.1} parent=0 // pred_fallthru
    _
  // Predicated region
  $region18: #{model_forward.1} parent=0 // pred_check
    _
  $region19: #{model_forward.1} parent=0 // pred_check_branch
    %29 = sbr.rel (0) target = $region21
  $region20: #{model_forward.1} parent=0 // pred_region
    _
  $region21: #{model_forward.1} parent=0 // pred_fallthru
    _
  // Predicated region
  $region22: #{model_forward.1} parent=0 // pred_check
    _
  $region23: #{model_forward.1} parent=0 // pred_check_branch
    %31 = sbr.rel (0) target = $region25
  $region24: #{model_forward.1} parent=0 // pred_region
    _
  $region25: #{model_forward.1} parent=0 // pred_fallthru
    _
  // Predicated region
  $region26: #{model_forward.1} parent=0 // pred_check
    _
  $region27: #{model_forward.1} parent=0 // pred_check_branch
    %33 = sbr.rel (0) target = $region29
  $region28: #{model_forward.1} parent=0 // pred_region
    _
  $region29: #{model_forward.1} parent=0 // pred_fallthru
    _
  // Predicated region
  $region30: #{model_forward.1} parent=0 // pred_check
    _
  $region31: #{model_forward.1} parent=0 // pred_check_branch
    %35 = sbr.rel (0) target = $region33
  $region32: #{model_forward.1} parent=0 // pred_region
    _
  $region33: #{model_forward.1} parent=0 // pred_fallthru
    _
  // Predicated region
  $region34: #{model_forward.1} parent=0 // pred_check
    _
  $region35: #{model_forward.1} parent=0 // pred_check_branch
    %37 = sbr.rel (0) target = $region37
  $region36: #{model_forward.1} parent=0 // pred_region
    _
  $region37: #{model_forward.1} parent=0 // pred_fallthru
    _
  // Predicated region
  $region38: #{model_forward.1} parent=0 // pred_check
    _
  $region39: #{model_forward.1} parent=0 // pred_check_branch
    %39 = sbr.rel (0) target = $region41
  $region40: #{model_forward.1} parent=0 // pred_region
    _
  $region41: #{model_forward.1} parent=0 // pred_fallthru
    _
  // Predicated region
  $region42: #{model_forward.1} parent=0 // pred_check
    _
  $region43: #{model_forward.1} parent=0 // pred_check_branch
    %41 = sbr.rel (0) target = $region45
  $region44: #{model_forward.1} parent=0 // pred_region
    _
  $region45: #{model_forward.1} parent=0 // pred_fallthru
    _
  %v42 = vld [vmem:[%s0] sm:$0xff]
  %v43 = vld [vmem:[%s0 + $0x8] sm:$0xff]
  %v44 = vld [vmem:[%s0 + $0x10] sm:$0xff]
  %v45 = vld [vmem:[%s0 + $0x18] sm:$0xff]
  %v46 = vld [vmem:[%s0 + $0x20] sm:$0xff]
  %v47 = vld [vmem:[%s0 + $0x28] sm:$0xff]
  %v48 = vld [vmem:[%s0 + $0x30] sm:$0xff]
  %v49 = vld [vmem:[%s0 + $0x38] sm:$0xff]
  %v50 = vld [vmem:[%s1] sm:$0xff]
  %v51 = vlaneseq
  %v52 = vshrl.u32 %v51, 7
  %v53 = vsub.s32 0, %v52
  %v54 = vrot.slane %v50, %v53
  %56 = vbcast.lane.b32.xlu0 %v54, 256
  %v57 = vpop.permute.xlu0 %56
  %v58 = vlaneseq
  %v59 = vshrl.u32 %v58, 7
  %v60 = vsub.s32 1, %v59
  %v61 = vrot.slane %v50, %v60
  %63 = vbcast.lane.b32.xlu0 %v61, 256
  %v64 = vpop.permute.xlu0 %63
  %v65 = vlaneseq
  %v66 = vshrl.u32 %v65, 7
  %v67 = vsub.s32 2, %v66
  %v68 = vrot.slane %v50, %v67
  %70 = vbcast.lane.b32.xlu0 %v68, 256
  %v71 = vpop.permute.xlu0 %70
  %v72 = vlaneseq
  %v73 = vshrl.u32 %v72, 7
  %v74 = vsub.s32 3, %v73
  %v75 = vrot.slane %v50, %v74
  %77 = vbcast.lane.b32.xlu0 %v75, 256
  %v78 = vpop.permute.xlu0 %77
  %v79 = vlaneseq
  %v80 = vshrl.u32 %v79, 7
  %v81 = vsub.s32 4, %v80
  %v82 = vrot.slane %v50, %v81
  %84 = vbcast.lane.b32.xlu0 %v82, 256
  %v85 = vpop.permute.xlu0 %84
  %v86 = vlaneseq
  %v87 = vshrl.u32 %v86, 7
  %v88 = vsub.s32 5, %v87
  %v89 = vrot.slane %v50, %v88
  %91 = vbcast.lane.b32.xlu0 %v89, 256
  %v92 = vpop.permute.xlu0 %91
  %v93 = vlaneseq
  %v94 = vshrl.u32 %v93, 7
  %v95 = vsub.s32 6, %v94
  %v96 = vrot.slane %v50, %v95
  %98 = vbcast.lane.b32.xlu0 %v96, 256
  %v99 = vpop.permute.xlu0 %98
  %v100 = vlaneseq
  %v101 = vshrl.u32 %v100, 7
  %v102 = vsub.s32 7, %v101
  %v103 = vrot.slane %v50, %v102
  %105 = vbcast.lane.b32.xlu0 %v103, 256
  %v106 = vpop.permute.xlu0 %105
  %vm107 = vcmask 64512
  %v108 = vsel %vm107, %v50, 0.0
  %109 = vadd.xlane.f32.xlu0 %v108
  %v110 = vpop.xlane.xlu0 %109
  %v111 = vmax.f32 %v110, 1.0
  %v112 = vmul.f32 %v42, %v57
  %v113 = vmul.f32 %v43, %v64
  %v114 = vmul.f32 %v44, %v71
  %v115 = vmul.f32 %v45, %v78
  %v116 = vmul.f32 %v46, %v85
  %v117 = vmul.f32 %v47, %v92
  %v118 = vmul.f32 %v48, %v99
  %v119 = vmul.f32 %v49, %v106
  %vm120 = vcmask 261120
  %v121 = vsel %vm120, %v112, 0.0
  %v122 = vrot.slane %v121, 4
  %v123 = vadd.f32 %v121, %v122
  %v124 = vrot.slane %v123, 2
  %v125 = vadd.f32 %v123, %v124
  %v126 = vrot.slane %v125, 1
  %v127 = vadd.f32 %v125, %v126
  %v128 = vsel %vm120, %v113, 0.0
  %v129 = vrot.slane %v128, 4
  %v130 = vadd.f32 %v128, %v129
  %v131 = vrot.slane %v130, 2
  %v132 = vadd.f32 %v130, %v131
  %v133 = vrot.slane %v132, 1
  %v134 = vadd.f32 %v132, %v133
  %v135 = vsel %vm120, %v114, 0.0
  %v136 = vrot.slane %v135, 4
  %v137 = vadd.f32 %v135, %v136
  %v138 = vrot.slane %v137, 2
  %v139 = vadd.f32 %v137, %v138
  %v140 = vrot.slane %v139, 1
  %v141 = vadd.f32 %v139, %v140
  %v142 = vsel %vm120, %v115, 0.0
  %v143 = vrot.slane %v142, 4
  %v144 = vadd.f32 %v142, %v143
  %v145 = vrot.slane %v144, 2
  %v146 = vadd.f32 %v144, %v145
  %v147 = vrot.slane %v146, 1
  %v148 = vadd.f32 %v146, %v147
  %v149 = vsel %vm120, %v116, 0.0
  %v150 = vrot.slane %v149, 4
  %v151 = vadd.f32 %v149, %v150
  %v152 = vrot.slane %v151, 2
  %v153 = vadd.f32 %v151, %v152
  %v154 = vrot.slane %v153, 1
  %v155 = vadd.f32 %v153, %v154
  %v156 = vsel %vm120, %v117, 0.0
  %v157 = vrot.slane %v156, 4
  %v158 = vadd.f32 %v156, %v157
  %v159 = vrot.slane %v158, 2
  %v160 = vadd.f32 %v158, %v159
  %v161 = vrot.slane %v160, 1
  %v162 = vadd.f32 %v160, %v161
  %v163 = vsel %vm120, %v118, 0.0
  %v164 = vrot.slane %v163, 4
  %v165 = vadd.f32 %v163, %v164
  %v166 = vrot.slane %v165, 2
  %v167 = vadd.f32 %v165, %v166
  %v168 = vrot.slane %v167, 1
  %v169 = vadd.f32 %v167, %v168
  %v170 = vsel %vm120, %v119, 0.0
  %v171 = vrot.slane %v170, 4
  %v172 = vadd.f32 %v170, %v171
  %v173 = vrot.slane %v172, 2
  %v174 = vadd.f32 %v172, %v173
  %v175 = vrot.slane %v174, 1
  %v176 = vadd.f32 %v174, %v175
  %v178 = vrot.slane %v111, 1
  %v179 = vrot.slane %v111, 2
  %v180 = vrot.slane %v111, 3
  %v181 = vrot.slane %v111, 4
  %v182 = vrot.slane %v111, 5
  %v183 = vrot.slane %v111, 6
  %v184 = vrot.slane %v111, 7
  %v193 = vrcp.pop %v111
  %v194 = vmul.f32 %v127, %v193
  %v195 = vrcp.pop %v178
  %v196 = vmul.f32 %v134, %v195
  %v197 = vrcp.pop %v179
  %v198 = vmul.f32 %v141, %v197
  %v199 = vrcp.pop %v180
  %v200 = vmul.f32 %v148, %v199
  %v201 = vrcp.pop %v181
  %v202 = vmul.f32 %v155, %v201
  %v203 = vrcp.pop %v182
  %v204 = vmul.f32 %v162, %v203
  %v205 = vrcp.pop %v183
  %v206 = vmul.f32 %v169, %v205
  %v207 = vrcp.pop %v184
  %v208 = vmul.f32 %v176, %v207
  %v209 = vld [vmem:[%s2] sm:$0xff]
  %v210 = vld [vmem:[%s2 + $0x8] sm:$0xff]
  %v211 = vld [vmem:[%s2 + $0x10] sm:$0xff]
  %v212 = vld [vmem:[%s2 + $0x18] sm:$0xff]
  %v221 = vrot.slane %v196, 7
  %vm222 = vcmask 1041409
  %v223 = vsel %vm222, %v221, %v194
  %v224 = vrot.slane %v198, 6
  %vm225 = vcmask 1042434
  %v226 = vsel %vm225, %v224, %v223
  %v227 = vrot.slane %v200, 5
  %vm228 = vcmask 1043459
  %v229 = vsel %vm228, %v227, %v226
  %v230 = vrot.slane %v202, 4
  %vm231 = vcmask 1044484
  %v232 = vsel %vm231, %v230, %v229
  %v233 = vrot.slane %v204, 3
  %vm234 = vcmask 1045509
  %v235 = vsel %vm234, %v233, %v232
  %v236 = vrot.slane %v206, 2
  %vm237 = vcmask 1046534
  %v238 = vsel %vm237, %v236, %v235
  %v239 = vrot.slane %v208, 1
  %vm240 = vcmask 1047559
  %v241 = vsel %vm240, %v239, %v238
  %v242 = vsel %vm120, %v241, 0
  %244 = vmatprep.subr.mxu0 0.0
  %245 = vmatpush1.msra.mxu0 %v209
  %246 = vmatprep.subr.mxu0 0.0
  %247 = vmatpush1.msra.mxu0 %v210
  %248 = vmatprep.subr.mxu0 0.0
  %249 = vmatpush1.msra.mxu0 %v211
  %250 = vmatprep.subr.mxu0 0.0
  %251 = vmatpush1.msra.mxu0 %v212
  %252 = vmatprep.subr.mxu0 0.0
  %253 = vmatpush1.msra.mxu0 0.0
  %254 = vmatprep.subr.mxu0 0.0
  %255 = vmatpush1.msra.mxu0 0.0
  %256 = vmatprep.subr.mxu0 0.0
  %257 = vmatpush1.msra.mxu0 0.0
  %258 = vmatprep.subr.mxu0 0.0
  %259 = vmatpush1.msra.mxu0 0.0
  %260 = vmatprep.subr.mxu0 0.0
  %261 = vmatpush1.msra.mxu0 0.0
  %262 = vmatprep.subr.mxu0 0.0
  %263 = vmatpush1.msra.mxu0 0.0
  %264 = vmatprep.subr.mxu0 0.0
  %265 = vmatpush1.msra.mxu0 0.0
  %266 = vmatprep.subr.mxu0 0.0
  %267 = vmatpush1.msra.mxu0 0.0
  %268 = vmatprep.subr.mxu0 0.0
  %269 = vmatpush1.msra.mxu0 0.0
  %270 = vmatprep.subr.mxu0 0.0
  %271 = vmatpush1.msra.mxu0 0.0
  %272 = vmatprep.subr.mxu0 0.0
  %273 = vmatpush1.msra.mxu0 0.0
  %274 = vmatprep.subr.mxu0 0.0
  %275 = vmatpush1.msra.mxu0 0.0
  %276 = vmatprep.subr.mxu0 0.0
  %277 = vmatpush1.msra.mxu0 0.0
  %278 = vmatprep.subr.mxu0 0.0
  %279 = vmatpush1.msra.mxu0 0.0
  %280 = vmatprep.subr.mxu0 0.0
  %281 = vmatpush1.msra.mxu0 0.0
  %282 = vmatprep.subr.mxu0 0.0
  %283 = vmatpush1.msra.mxu0 0.0
  %284 = vmatprep.subr.mxu0 0.0
  %285 = vmatpush1.msra.mxu0 0.0
  %286 = vmatprep.subr.mxu0 0.0
  %287 = vmatpush1.msra.mxu0 0.0
  %288 = vmatprep.subr.mxu0 0.0
  %289 = vmatpush1.msra.mxu0 0.0
  %290 = vmatprep.subr.mxu0 0.0
  %291 = vmatpush1.msra.mxu0 0.0
  %292 = vmatprep.subr.mxu0 0.0
  %293 = vmatpush1.msra.mxu0 0.0
  %294 = vmatprep.subr.mxu0 0.0
  %295 = vmatpush1.msra.mxu0 0.0
  %296 = vmatprep.subr.mxu0 0.0
  %297 = vmatpush1.msra.mxu0 0.0
  %298 = vmatprep.subr.mxu0 0.0
  %299 = vmatpush1.msra.mxu0 0.0
  %300 = vmatprep.subr.mxu0 0.0
  %301 = vmatpush1.msra.mxu0 0.0
  %302 = vmatprep.subr.mxu0 0.0
  %303 = vmatpush1.msra.mxu0 0.0
  %304 = vmatprep.subr.mxu0 0.0
  %305 = vmatpush1.msra.mxu0 0.0
  %306 = vmatprep.subr.mxu0 0.0
  %307 = vmatpush1.msra.mxu0 0.0
  %308 = vmatprep.mubr.f32.mxu0 0.0
  %309 = vmatmul.mubr.f32.gmra.mrb[0].mxu0 %v242
  %v310 = vpop.f32.mrb[0].mxu0
  %v311 = vadd.f32 0.0, %v310
  %v312 = vpop.f32.mrb[0].mxu0
  %313 = vdwg.mxu0
  %v314 = vmul.f32 %v311, %v311
  %v315 = vsel %vm120, %v314, 0.0
  %316 = vadd.xlane.f32.xlu0 %v315
  %v317 = vpop.xlane.xlu0 %316
  %v318 = vld [vmem:[%s4] sm:$0xff]
  %v319 = vld [vmem:[%s4 + $0x8] sm:$0xff]
  %v320 = vld [vmem:[%s4 + $0x10] sm:$0xff]
  %v321 = vld [vmem:[%s4 + $0x18] sm:$0xff]
  %v323 = vsel %vm120, %v311, 0
  %325 = vmatprep.subr.mxu0 0.0
  %326 = vmatpush1.msra.mxu0 %v318
  %327 = vmatprep.subr.mxu0 0.0
  %328 = vmatpush1.msra.mxu0 %v319
  %329 = vmatprep.subr.mxu0 0.0
  %330 = vmatpush1.msra.mxu0 %v320
  %331 = vmatprep.subr.mxu0 0.0
  %332 = vmatpush1.msra.mxu0 %v321
  %333 = vmatprep.subr.mxu0 0.0
  %334 = vmatpush1.msra.mxu0 0.0
  %335 = vmatprep.subr.mxu0 0.0
  %336 = vmatpush1.msra.mxu0 0.0
  %337 = vmatprep.subr.mxu0 0.0
  %338 = vmatpush1.msra.mxu0 0.0
  %339 = vmatprep.subr.mxu0 0.0
  %340 = vmatpush1.msra.mxu0 0.0
  %341 = vmatprep.subr.mxu0 0.0
  %342 = vmatpush1.msra.mxu0 0.0
  %343 = vmatprep.subr.mxu0 0.0
  %344 = vmatpush1.msra.mxu0 0.0
  %345 = vmatprep.subr.mxu0 0.0
  %346 = vmatpush1.msra.mxu0 0.0
  %347 = vmatprep.subr.mxu0 0.0
  %348 = vmatpush1.msra.mxu0 0.0
  %349 = vmatprep.subr.mxu0 0.0
  %350 = vmatpush1.msra.mxu0 0.0
  %351 = vmatprep.subr.mxu0 0.0
  %352 = vmatpush1.msra.mxu0 0.0
  %353 = vmatprep.subr.mxu0 0.0
  %354 = vmatpush1.msra.mxu0 0.0
  %355 = vmatprep.subr.mxu0 0.0
  %356 = vmatpush1.msra.mxu0 0.0
  %357 = vmatprep.subr.mxu0 0.0
  %358 = vmatpush1.msra.mxu0 0.0
  %359 = vmatprep.subr.mxu0 0.0
  %360 = vmatpush1.msra.mxu0 0.0
  %361 = vmatprep.subr.mxu0 0.0
  %362 = vmatpush1.msra.mxu0 0.0
  %363 = vmatprep.subr.mxu0 0.0
  %364 = vmatpush1.msra.mxu0 0.0
  %365 = vmatprep.subr.mxu0 0.0
  %366 = vmatpush1.msra.mxu0 0.0
  %367 = vmatprep.subr.mxu0 0.0
  %368 = vmatpush1.msra.mxu0 0.0
  %369 = vmatprep.subr.mxu0 0.0
  %370 = vmatpush1.msra.mxu0 0.0
  %371 = vmatprep.subr.mxu0 0.0
  %372 = vmatpush1.msra.mxu0 0.0
  %373 = vmatprep.subr.mxu0 0.0
  %374 = vmatpush1.msra.mxu0 0.0
  %375 = vmatprep.subr.mxu0 0.0
  %376 = vmatpush1.msra.mxu0 0.0
  %377 = vmatprep.subr.mxu0 0.0
  %378 = vmatpush1.msra.mxu0 0.0
  %379 = vmatprep.subr.mxu0 0.0
  %380 = vmatpush1.msra.mxu0 0.0
  %381 = vmatprep.subr.mxu0 0.0
  %382 = vmatpush1.msra.mxu0 0.0
  %383 = vmatprep.subr.mxu0 0.0
  %384 = vmatpush1.msra.mxu0 0.0
  %385 = vmatprep.subr.mxu0 0.0
  %386 = vmatpush1.msra.mxu0 0.0
  %387 = vmatprep.subr.mxu0 0.0
  %388 = vmatpush1.msra.mxu0 0.0
  %389 = vmatprep.mubr.f32.mxu0 0.0
  %390 = vmatmul.mubr.f32.gmra.mrb[0].mxu0 %v323
  %v391 = vpop.f32.mrb[0].mxu0
  %v392 = vadd.f32 0.0, %v391
  %v393 = vpop.f32.mrb[0].mxu0
  %394 = vdwg.mxu0
  %v395 = vmul.f32 %v392, 2.0
  %v396 = vsub.f32 %v317, %v395
  %v397 = vld [vmem:[%s5] sm:$0x1]
  %v399 = vlaneseq
  %v400 = vshrl.u32 %v399, 7
  %v401 = vsub.s32 0, %v400
  %v402 = vrot.slane %v397, %v401
  %v404 = vadd.f32 %v396, %v402
  %vm405 = vcmask 130048
  %v406 = vsel %vm405, %v404, inf
  %407 = vmin.xlane.f32.xlu0 %v406
  %v408 = vpop.xlane.xlu0 %407
  %v409 = vlaneseq
  %v410 = vand.u32 %v409, 127
  %vm411 = vcmp.le.f32.partialorder %v404, %v408
  %v412 = vsel %vm411, %v410, 16
  %v413 = vsel %vm405, %v412, 2147483647
  %v414 = vand.u32 %v413, 65535
  %v415 = vshra.s32 %v413, 16
  %v416 = vcvt.s32.f32 %v414
  %v417 = vcvt.s32.f32 %v415
  %418 = vmin.xlane.f32.xlu0 %v417
  %v419 = vpop.xlane.xlu0 %418
  %vm420 = vcmp.eq.f32.partialorder %v417, %v419
  %v421 = vsel %vm420, %v416, inf
  %422 = vmin.xlane.f32.xlu0 %v421
  %v423 = vpop.xlane.xlu0 %422
  %v424 = vcvt.f32.s32 %v423
  %v425 = vcvt.f32.s32 %v419
  %v426 = vshll.u32 %v425, 16
  %v427 = vadd.s32 %v426, %v424
  %vm428 = vcmp.eq.s32.totalorder %v410, %v427
  %v429 = vsel %vm428, 1, 0
  %v430 = vcvt.s32.f32 %v429
  %v431 = vld [vmem:[%s3] sm:$0xff]
  %v432 = vld [vmem:[%s3 + $0x8] sm:$0xff]
  %v434 = vsel %vm405, %v430, 0
  %436 = vmatprep.subr.mxu0 0.0
  %437 = vmatpush1.msra.mxu0 %v431
  %438 = vmatprep.subr.mxu0 0.0
  %439 = vmatpush1.msra.mxu0 %v432
  %440 = vmatprep.subr.mxu0 0.0
  %441 = vmatpush1.msra.mxu0 0.0
  %442 = vmatprep.subr.mxu0 0.0
  %443 = vmatpush1.msra.mxu0 0.0
  %444 = vmatprep.subr.mxu0 0.0
  %445 = vmatpush1.msra.mxu0 0.0
  %446 = vmatprep.subr.mxu0 0.0
  %447 = vmatpush1.msra.mxu0 0.0
  %448 = vmatprep.subr.mxu0 0.0
  %449 = vmatpush1.msra.mxu0 0.0
  %450 = vmatprep.subr.mxu0 0.0
  %451 = vmatpush1.msra.mxu0 0.0
  %452 = vmatprep.subr.mxu0 0.0
  %453 = vmatpush1.msra.mxu0 0.0
  %454 = vmatprep.subr.mxu0 0.0
  %455 = vmatpush1.msra.mxu0 0.0
  %456 = vmatprep.subr.mxu0 0.0
  %457 = vmatpush1.msra.mxu0 0.0
  %458 = vmatprep.subr.mxu0 0.0
  %459 = vmatpush1.msra.mxu0 0.0
  %460 = vmatprep.subr.mxu0 0.0
  %461 = vmatpush1.msra.mxu0 0.0
  %462 = vmatprep.subr.mxu0 0.0
  %463 = vmatpush1.msra.mxu0 0.0
  %464 = vmatprep.subr.mxu0 0.0
  %465 = vmatpush1.msra.mxu0 0.0
  %466 = vmatprep.subr.mxu0 0.0
  %467 = vmatpush1.msra.mxu0 0.0
  %468 = vmatprep.subr.mxu0 0.0
  %469 = vmatpush1.msra.mxu0 0.0
  %470 = vmatprep.subr.mxu0 0.0
  %471 = vmatpush1.msra.mxu0 0.0
  %472 = vmatprep.subr.mxu0 0.0
  %473 = vmatpush1.msra.mxu0 0.0
  %474 = vmatprep.subr.mxu0 0.0
  %475 = vmatpush1.msra.mxu0 0.0
  %476 = vmatprep.subr.mxu0 0.0
  %477 = vmatpush1.msra.mxu0 0.0
  %478 = vmatprep.subr.mxu0 0.0
  %479 = vmatpush1.msra.mxu0 0.0
  %480 = vmatprep.subr.mxu0 0.0
  %481 = vmatpush1.msra.mxu0 0.0
  %482 = vmatprep.subr.mxu0 0.0
  %483 = vmatpush1.msra.mxu0 0.0
  %484 = vmatprep.subr.mxu0 0.0
  %485 = vmatpush1.msra.mxu0 0.0
  %486 = vmatprep.subr.mxu0 0.0
  %487 = vmatpush1.msra.mxu0 0.0
  %488 = vmatprep.subr.mxu0 0.0
  %489 = vmatpush1.msra.mxu0 0.0
  %490 = vmatprep.subr.mxu0 0.0
  %491 = vmatpush1.msra.mxu0 0.0
  %492 = vmatprep.subr.mxu0 0.0
  %493 = vmatpush1.msra.mxu0 0.0
  %494 = vmatprep.subr.mxu0 0.0
  %495 = vmatpush1.msra.mxu0 0.0
  %496 = vmatprep.subr.mxu0 0.0
  %497 = vmatpush1.msra.mxu0 0.0
  %498 = vmatprep.subr.mxu0 0.0
  %499 = vmatpush1.msra.mxu0 0.0
  %500 = vmatprep.mubr.f32.mxu0 0.0
  %501 = vmatmul.mubr.f32.gmra.mrb[0].mxu0 %v434
  %v502 = vpop.f32.mrb[0].mxu0
  %v503 = vadd.f32 0.0, %v502
  %v504 = vpop.f32.mrb[0].mxu0
  %505 = vdwg.mxu0
  %506 = vst.msk [vmem:[%s11] sm:$0xff] %vm120, %v503
  %507 = vst [vmem:[%s12] sm:$0xff] %v427
  %v508 = vld [vmem:[%s6] sm:$0xff]
  %v509 = vld [vmem:[%s6 + $0x8] sm:$0xff]
  %v510 = vld [vmem:[%s6 + $0x10] sm:$0xff]
  %v511 = vld [vmem:[%s6 + $0x18] sm:$0xff]
  %v512 = vld [vmem:[%s6 + $0x20] sm:$0xff]
  %v513 = vld [vmem:[%s6 + $0x28] sm:$0xff]
  %v514 = vld [vmem:[%s6 + $0x30] sm:$0xff]
  %v515 = vld [vmem:[%s6 + $0x38] sm:$0xff]
  %v517 = vsel %vm120, %v503, 0
  %519 = vmatprep.subr.mxu0 %v509
  %520 = vmatpush1.msra.mxu0 %v508
  %521 = vmatprep.subr.mxu0 %v511
  %522 = vmatpush1.msra.mxu0 %v510
  %523 = vmatprep.subr.mxu0 %v513
  %524 = vmatpush1.msra.mxu0 %v512
  %525 = vmatprep.subr.mxu0 %v515
  %526 = vmatpush1.msra.mxu0 %v514
  %527 = vmatprep.subr.mxu0 0.0
  %528 = vmatpush1.msra.mxu0 0.0
  %529 = vmatprep.subr.mxu0 0.0
  %530 = vmatpush1.msra.mxu0 0.0
  %531 = vmatprep.subr.mxu0 0.0
  %532 = vmatpush1.msra.mxu0 0.0
  %533 = vmatprep.subr.mxu0 0.0
  %534 = vmatpush1.msra.mxu0 0.0
  %535 = vmatprep.subr.mxu0 0.0
  %536 = vmatpush1.msra.mxu0 0.0
  %537 = vmatprep.subr.mxu0 0.0
  %538 = vmatpush1.msra.mxu0 0.0
  %539 = vmatprep.subr.mxu0 0.0
  %540 = vmatpush1.msra.mxu0 0.0
  %541 = vmatprep.subr.mxu0 0.0
  %542 = vmatpush1.msra.mxu0 0.0
  %543 = vmatprep.subr.mxu0 0.0
  %544 = vmatpush1.msra.mxu0 0.0
  %545 = vmatprep.subr.mxu0 0.0
  %546 = vmatpush1.msra.mxu0 0.0
  %547 = vmatprep.subr.mxu0 0.0
  %548 = vmatpush1.msra.mxu0 0.0
  %549 = vmatprep.subr.mxu0 0.0
  %550 = vmatpush1.msra.mxu0 0.0
  %551 = vmatprep.subr.mxu0 0.0
  %552 = vmatpush1.msra.mxu0 0.0
  %553 = vmatprep.subr.mxu0 0.0
  %554 = vmatpush1.msra.mxu0 0.0
  %555 = vmatprep.subr.mxu0 0.0
  %556 = vmatpush1.msra.mxu0 0.0
  %557 = vmatprep.subr.mxu0 0.0
  %558 = vmatpush1.msra.mxu0 0.0
  %559 = vmatprep.subr.mxu0 0.0
  %560 = vmatpush1.msra.mxu0 0.0
  %561 = vmatprep.subr.mxu0 0.0
  %562 = vmatpush1.msra.mxu0 0.0
  %563 = vmatprep.subr.mxu0 0.0
  %564 = vmatpush1.msra.mxu0 0.0
  %565 = vmatprep.subr.mxu0 0.0
  %566 = vmatpush1.msra.mxu0 0.0
  %567 = vmatprep.subr.mxu0 0.0
  %568 = vmatpush1.msra.mxu0 0.0
  %569 = vmatprep.subr.mxu0 0.0
  %570 = vmatpush1.msra.mxu0 0.0
  %571 = vmatprep.subr.mxu0 0.0
  %572 = vmatpush1.msra.mxu0 0.0
  %573 = vmatprep.subr.mxu0 0.0
  %574 = vmatpush1.msra.mxu0 0.0
  %575 = vmatprep.subr.mxu0 0.0
  %576 = vmatpush1.msra.mxu0 0.0
  %577 = vmatprep.subr.mxu0 0.0
  %578 = vmatpush1.msra.mxu0 0.0
  %579 = vmatprep.subr.mxu0 0.0
  %580 = vmatpush1.msra.mxu0 0.0
  %581 = vmatprep.subr.mxu0 0.0
  %582 = vmatpush1.msra.mxu0 0.0
  %583 = vmatprep.mubr.f32.mxu0 0.0
  %584 = vmatmul.mubr.f32.gmra.mrb[0].mxu0 %v517
  %v585 = vpop.f32.mrb[0].mxu0
  %v586 = vadd.f32 0.0, %v585
  %v587 = vpop.f32.mrb[0].mxu0
  %v588 = vadd.f32 0.0, %v587
  %589 = vdwg.mxu0
  %v590 = vmax.f32 %v586, %v588
  %591 = vmax.xlane.f32.xlu0 %v590
  %v592 = vpop.xlane.xlu0 %591
  %v593 = vsub.f32 %v586, %v592
  %v594 = vsub.f32 %v588, %v592
  %v595 = vmul.f32 %v593, 1.442695
  %v596 = vpow.pop %v595
  %v597 = vmul.f32 %v594, 1.442695
  %v598 = vpow.pop %v597
  %v599 = vld [vmem:[%s7] sm:$0xff]
  %v600 = vld [vmem:[%s7 + $0x8] sm:$0xff]
  %v601 = vld [vmem:[%s7 + $0x10] sm:$0xff]
  %v602 = vld [vmem:[%s7 + $0x18] sm:$0xff]
  %v603 = vld [vmem:[%s7 + $0x20] sm:$0xff]
  %v604 = vld [vmem:[%s7 + $0x28] sm:$0xff]
  %v605 = vld [vmem:[%s7 + $0x30] sm:$0xff]
  %v606 = vld [vmem:[%s7 + $0x38] sm:$0xff]
  %v607 = vld [vmem:[%s7 + $0x40] sm:$0xff]
  %v608 = vld [vmem:[%s7 + $0x48] sm:$0xff]
  %v609 = vld [vmem:[%s7 + $0x50] sm:$0xff]
  %v610 = vld [vmem:[%s7 + $0x58] sm:$0xff]
  %v611 = vld [vmem:[%s7 + $0x60] sm:$0xff]
  %v612 = vld [vmem:[%s7 + $0x68] sm:$0xff]
  %v613 = vld [vmem:[%s7 + $0x70] sm:$0xff]
  %v614 = vld [vmem:[%s7 + $0x78] sm:$0xff]
  %v615 = vld [vmem:[%s7 + $0x80] sm:$0xff]
  %v616 = vld [vmem:[%s7 + $0x88] sm:$0xff]
  %v617 = vld [vmem:[%s7 + $0x90] sm:$0xff]
  %v618 = vld [vmem:[%s7 + $0x98] sm:$0xff]
  %v619 = vld [vmem:[%s7 + $0xa0] sm:$0xff]
  %v620 = vld [vmem:[%s7 + $0xa8] sm:$0xff]
  %v621 = vld [vmem:[%s7 + $0xb0] sm:$0xff]
  %v622 = vld [vmem:[%s7 + $0xb8] sm:$0xff]
  %v623 = vld [vmem:[%s7 + $0xc0] sm:$0xff]
  %v624 = vld [vmem:[%s7 + $0xc8] sm:$0xff]
  %v625 = vld [vmem:[%s7 + $0xd0] sm:$0xff]
  %v626 = vld [vmem:[%s7 + $0xd8] sm:$0xff]
  %v627 = vld [vmem:[%s7 + $0xe0] sm:$0xff]
  %v628 = vld [vmem:[%s7 + $0xe8] sm:$0xff]
  %v629 = vld [vmem:[%s7 + $0xf0] sm:$0xff]
  %v630 = vld [vmem:[%s7 + $0xf8] sm:$0xff]
  %631 = vmatprep.subr.mxu0 0.0
  %632 = vmatpush1.msra.mxu0 %v599
  %633 = vmatprep.subr.mxu0 0.0
  %634 = vmatpush1.msra.mxu0 %v600
  %635 = vmatprep.subr.mxu0 0.0
  %636 = vmatpush1.msra.mxu0 %v601
  %637 = vmatprep.subr.mxu0 0.0
  %638 = vmatpush1.msra.mxu0 %v602
  %639 = vmatprep.subr.mxu0 0.0
  %640 = vmatpush1.msra.mxu0 %v603
  %641 = vmatprep.subr.mxu0 0.0
  %642 = vmatpush1.msra.mxu0 %v604
  %643 = vmatprep.subr.mxu0 0.0
  %644 = vmatpush1.msra.mxu0 %v605
  %645 = vmatprep.subr.mxu0 0.0
  %646 = vmatpush1.msra.mxu0 %v606
  %647 = vmatprep.subr.mxu0 0.0
  %648 = vmatpush1.msra.mxu0 %v607
  %649 = vmatprep.subr.mxu0 0.0
  %650 = vmatpush1.msra.mxu0 %v608
  %651 = vmatprep.subr.mxu0 0.0
  %652 = vmatpush1.msra.mxu0 %v609
  %653 = vmatprep.subr.mxu0 0.0
  %654 = vmatpush1.msra.mxu0 %v610
  %655 = vmatprep.subr.mxu0 0.0
  %656 = vmatpush1.msra.mxu0 %v611
  %657 = vmatprep.subr.mxu0 0.0
  %658 = vmatpush1.msra.mxu0 %v612
  %659 = vmatprep.subr.mxu0 0.0
  %660 = vmatpush1.msra.mxu0 %v613
  %661 = vmatprep.subr.mxu0 0.0
  %662 = vmatpush1.msra.mxu0 %v614
  %663 = vmatprep.subr.mxu0 0.0
  %664 = vmatpush1.msra.mxu0 %v615
  %665 = vmatprep.subr.mxu0 0.0
  %666 = vmatpush1.msra.mxu0 %v616
  %667 = vmatprep.subr.mxu0 0.0
  %668 = vmatpush1.msra.mxu0 %v617
  %669 = vmatprep.subr.mxu0 0.0
  %670 = vmatpush1.msra.mxu0 %v618
  %671 = vmatprep.subr.mxu0 0.0
  %672 = vmatpush1.msra.mxu0 %v619
  %673 = vmatprep.subr.mxu0 0.0
  %674 = vmatpush1.msra.mxu0 %v620
  %675 = vmatprep.subr.mxu0 0.0
  %676 = vmatpush1.msra.mxu0 %v621
  %677 = vmatprep.subr.mxu0 0.0
  %678 = vmatpush1.msra.mxu0 %v622
  %679 = vmatprep.subr.mxu0 0.0
  %680 = vmatpush1.msra.mxu0 %v623
  %681 = vmatprep.subr.mxu0 0.0
  %682 = vmatpush1.msra.mxu0 %v624
  %683 = vmatprep.subr.mxu0 0.0
  %684 = vmatpush1.msra.mxu0 %v625
  %685 = vmatprep.subr.mxu0 0.0
  %686 = vmatpush1.msra.mxu0 %v626
  %687 = vmatprep.subr.mxu0 0.0
  %688 = vmatpush1.msra.mxu0 %v627
  %689 = vmatprep.subr.mxu0 0.0
  %690 = vmatpush1.msra.mxu0 %v628
  %691 = vmatprep.subr.mxu0 0.0
  %692 = vmatpush1.msra.mxu0 %v629
  %693 = vmatprep.subr.mxu0 0.0
  %694 = vmatpush1.msra.mxu0 %v630
  %695 = vmatprep.mubr.f32.mxu0 %v598
  %696 = vmatmul.mubr.f32.gmra.mrb[0].mxu0 %v596
  %v697 = vpop.f32.mrb[0].mxu0
  %v698 = vadd.f32 0.0, %v697
  %v699 = vpop.f32.mrb[0].mxu0
  %700 = vdwg.mxu0
  %v701 = vld [vmem:[%s8] sm:$0xff]
  %v702 = vld [vmem:[%s8 + $0x8] sm:$0xff]
  %v704 = vsel %vm107, %v698, 0
  %706 = vmatprep.subr.mxu0 %v702
  %707 = vmatpush1.msra.mxu0 %v701
  %708 = vmatprep.subr.mxu0 0.0
  %709 = vmatpush1.msra.mxu0 0.0
  %710 = vmatprep.subr.mxu0 0.0
  %711 = vmatpush1.msra.mxu0 0.0
  %712 = vmatprep.subr.mxu0 0.0
  %713 = vmatpush1.msra.mxu0 0.0
  %714 = vmatprep.subr.mxu0 0.0
  %715 = vmatpush1.msra.mxu0 0.0
  %716 = vmatprep.subr.mxu0 0.0
  %717 = vmatpush1.msra.mxu0 0.0
  %718 = vmatprep.subr.mxu0 0.0
  %719 = vmatpush1.msra.mxu0 0.0
  %720 = vmatprep.subr.mxu0 0.0
  %721 = vmatpush1.msra.mxu0 0.0
  %722 = vmatprep.subr.mxu0 0.0
  %723 = vmatpush1.msra.mxu0 0.0
  %724 = vmatprep.subr.mxu0 0.0
  %725 = vmatpush1.msra.mxu0 0.0
  %726 = vmatprep.subr.mxu0 0.0
  %727 = vmatpush1.msra.mxu0 0.0
  %728 = vmatprep.subr.mxu0 0.0
  %729 = vmatpush1.msra.mxu0 0.0
  %730 = vmatprep.subr.mxu0 0.0
  %731 = vmatpush1.msra.mxu0 0.0
  %732 = vmatprep.subr.mxu0 0.0
  %733 = vmatpush1.msra.mxu0 0.0
  %734 = vmatprep.subr.mxu0 0.0
  %735 = vmatpush1.msra.mxu0 0.0
  %736 = vmatprep.subr.mxu0 0.0
  %737 = vmatpush1.msra.mxu0 0.0
  %738 = vmatprep.subr.mxu0 0.0
  %739 = vmatpush1.msra.mxu0 0.0
  %740 = vmatprep.subr.mxu0 0.0
  %741 = vmatpush1.msra.mxu0 0.0
  %742 = vmatprep.subr.mxu0 0.0
  %743 = vmatpush1.msra.mxu0 0.0
  %744 = vmatprep.subr.mxu0 0.0
  %745 = vmatpush1.msra.mxu0 0.0
  %746 = vmatprep.subr.mxu0 0.0
  %747 = vmatpush1.msra.mxu0 0.0
  %748 = vmatprep.subr.mxu0 0.0
  %749 = vmatpush1.msra.mxu0 0.0
  %750 = vmatprep.subr.mxu0 0.0
  %751 = vmatpush1.msra.mxu0 0.0
  %752 = vmatprep.subr.mxu0 0.0
  %753 = vmatpush1.msra.mxu0 0.0
  %754 = vmatprep.subr.mxu0 0.0
  %755 = vmatpush1.msra.mxu0 0.0
  %756 = vmatprep.subr.mxu0 0.0
  %757 = vmatpush1.msra.mxu0 0.0
  %758 = vmatprep.subr.mxu0 0.0
  %759 = vmatpush1.msra.mxu0 0.0
  %760 = vmatprep.subr.mxu0 0.0
  %761 = vmatpush1.msra.mxu0 0.0
  %762 = vmatprep.subr.mxu0 0.0
  %763 = vmatpush1.msra.mxu0 0.0
  %764 = vmatprep.subr.mxu0 0.0
  %765 = vmatpush1.msra.mxu0 0.0
  %766 = vmatprep.subr.mxu0 0.0
  %767 = vmatpush1.msra.mxu0 0.0
  %768 = vmatprep.subr.mxu0 0.0
  %769 = vmatpush1.msra.mxu0 0.0
  %770 = vmatprep.mubr.f32.mxu0 0.0
  %771 = vmatmul.mubr.f32.gmra.mrb[0].mxu0 %v704
  %v772 = vpop.f32.mrb[0].mxu0
  %v773 = vadd.f32 0.0, %v772
  %v774 = vpop.f32.mrb[0].mxu0
  %v775 = vadd.f32 0.0, %v774
  %776 = vdwg.mxu0
  %v777 = vrcp.pop %v773
  %v778 = vmul.f32 %v596, %v777
  %v779 = vrcp.pop %v775
  %v780 = vmul.f32 %v598, %v779
  %781 = vst [vmem:[%s13] sm:$0xff] %v778
  %782 = vst [vmem:[%s13 + $0x8] sm:$0xff] %v780
  %v783 = vld [vmem:[%s9] sm:$0xff]
  %v784 = vld [vmem:[%s9 + $0x8] sm:$0xff]
  %v785 = vld [vmem:[%s9 + $0x10] sm:$0xff]
  %v786 = vld [vmem:[%s9 + $0x18] sm:$0xff]
  %v787 = vld [vmem:[%s10] sm:$0x1]
  %v789 = vlaneseq
  %v790 = vshrl.u32 %v789, 7
  %v791 = vsub.s32 0, %v790
  %v792 = vrot.slane %v787, %v791
  %794 = vmatprep.subr.mxu0 0.0
  %795 = vmatpush1.msra.mxu0 %v783
  %796 = vmatprep.subr.mxu0 0.0
  %797 = vmatpush1.msra.mxu0 %v784
  %798 = vmatprep.subr.mxu0 0.0
  %799 = vmatpush1.msra.mxu0 %v785
  %800 = vmatprep.subr.mxu0 0.0
  %801 = vmatpush1.msra.mxu0 %v786
  %802 = vmatprep.subr.mxu0 0.0
  %803 = vmatpush1.msra.mxu0 0.0
  %804 = vmatprep.subr.mxu0 0.0
  %805 = vmatpush1.msra.mxu0 0.0
  %806 = vmatprep.subr.mxu0 0.0
  %807 = vmatpush1.msra.mxu0 0.0
  %808 = vmatprep.subr.mxu0 0.0
  %809 = vmatpush1.msra.mxu0 0.0
  %810 = vmatprep.subr.mxu0 0.0
  %811 = vmatpush1.msra.mxu0 0.0
  %812 = vmatprep.subr.mxu0 0.0
  %813 = vmatpush1.msra.mxu0 0.0
  %814 = vmatprep.subr.mxu0 0.0
  %815 = vmatpush1.msra.mxu0 0.0
  %816 = vmatprep.subr.mxu0 0.0
  %817 = vmatpush1.msra.mxu0 0.0
  %818 = vmatprep.subr.mxu0 0.0
  %819 = vmatpush1.msra.mxu0 0.0
  %820 = vmatprep.subr.mxu0 0.0
  %821 = vmatpush1.msra.mxu0 0.0
  %822 = vmatprep.subr.mxu0 0.0
  %823 = vmatpush1.msra.mxu0 0.0
  %824 = vmatprep.subr.mxu0 0.0
  %825 = vmatpush1.msra.mxu0 0.0
  %826 = vmatprep.subr.mxu0 0.0
  %827 = vmatpush1.msra.mxu0 0.0
  %828 = vmatprep.subr.mxu0 0.0
  %829 = vmatpush1.msra.mxu0 0.0
  %830 = vmatprep.subr.mxu0 0.0
  %831 = vmatpush1.msra.mxu0 0.0
  %832 = vmatprep.subr.mxu0 0.0
  %833 = vmatpush1.msra.mxu0 0.0
  %834 = vmatprep.subr.mxu0 0.0
  %835 = vmatpush1.msra.mxu0 0.0
  %836 = vmatprep.subr.mxu0 0.0
  %837 = vmatpush1.msra.mxu0 0.0
  %838 = vmatprep.subr.mxu0 0.0
  %839 = vmatpush1.msra.mxu0 0.0
  %840 = vmatprep.subr.mxu0 0.0
  %841 = vmatpush1.msra.mxu0 0.0
  %842 = vmatprep.subr.mxu0 0.0
  %843 = vmatpush1.msra.mxu0 0.0
  %844 = vmatprep.subr.mxu0 0.0
  %845 = vmatpush1.msra.mxu0 0.0
  %846 = vmatprep.subr.mxu0 0.0
  %847 = vmatpush1.msra.mxu0 0.0
  %848 = vmatprep.subr.mxu0 0.0
  %849 = vmatpush1.msra.mxu0 0.0
  %850 = vmatprep.subr.mxu0 0.0
  %851 = vmatpush1.msra.mxu0 0.0
  %852 = vmatprep.subr.mxu0 0.0
  %853 = vmatpush1.msra.mxu0 0.0
  %854 = vmatprep.subr.mxu0 0.0
  %855 = vmatpush1.msra.mxu0 0.0
  %856 = vmatprep.subr.mxu0 0.0
  %857 = vmatpush1.msra.mxu0 0.0
  %858 = vmatprep.mubr.f32.mxu0 0.0
  %859 = vmatmul.mubr.f32.gmra.mrb[0].mxu0 %v517
  %v860 = vpop.f32.mrb[0].mxu0
  %v861 = vadd.f32 %v792, %v860
  %v862 = vpop.f32.mrb[0].mxu0
  %863 = vdwg.mxu0
  %864 = vmax.xlane.f32.xlu0 %v861
  %v865 = vpop.xlane.xlu0 %864
  %v866 = vsub.f32 %v861, %v865
  %v867 = vmul.f32 %v866, 1.442695
  %v868 = vpow.pop %v867
  %869 = vadd.xlane.f32.xlu0 %v868
  %v870 = vpop.xlane.xlu0 %869
  %v871 = vrcp.pop %v870
  %v872 = vmul.f32 %v868, %v871
  %873 = vst [vmem:[%s14] sm:$0xff] %v872
  // Predicated region
  $region46: #{model_forward.1} parent=0 // pred_check
    _
  $region47: #{model_forward.1} parent=0 // pred_check_branch
    %875 = sbr.rel (0) target = $region49
  $region48: #{model_forward.1} parent=0 // pred_region
    _
  $region49: #{model_forward.1} parent=0 // pred_fallthru
    _
  // Predicated region
  $region50: #{model_forward.1} parent=0 // pred_check
    _
  $region51: #{model_forward.1} parent=0 // pred_check_branch
    %877 = sbr.rel (0) target = $region53
  $region52: #{model_forward.1} parent=0 // pred_region
    _
  $region53: #{model_forward.1} parent=0 // pred_fallthru
    _
  // Predicated region
  $region54: #{model_forward.1} parent=0 // pred_check
    _
  $region55: #{model_forward.1} parent=0 // pred_check_branch
    %879 = sbr.rel (0) target = $region57
  $region56: #{model_forward.1} parent=0 // pred_region
    _
  $region57: #{model_forward.1} parent=0 // pred_fallthru
    _
  // Predicated region
  $region58: #{model_forward.1} parent=0 // pred_check
    _
  $region59: #{model_forward.1} parent=0 // pred_check_branch
    %881 = sbr.rel (0) target = $region61
  $region60: #{model_forward.1} parent=0 // pred_region
    _
  $region61: #{model_forward.1} parent=0 // pred_fallthru
    _
  // Predicated region
  $region62: #{model_forward.1} parent=0 // pred_check
    _
  $region63: #{model_forward.1} parent=0 // pred_check_branch
    %883 = sbr.rel (0) target = $region65
  $region64: #{model_forward.1} parent=0 // pred_region
    _
  $region65: #{model_forward.1} parent=0 // pred_fallthru
    _
  // Predicated region
  $region66: #{model_forward.1} parent=0 // pred_check
    _
  $region67: #{model_forward.1} parent=0 // pred_check_branch
    %885 = sbr.rel (0) target = $region69
  $region68: #{model_forward.1} parent=0 // pred_region
    _
  $region69: #{model_forward.1} parent=0 // pred_fallthru
    _
  // Predicated region
  $region70: #{model_forward.1} parent=0 // pred_check
    _
  $region71: #{model_forward.1} parent=0 // pred_check_branch
    %887 = sbr.rel (0) target = $region73
  $region72: #{model_forward.1} parent=0 // pred_region
    _
  $region73: #{model_forward.1} parent=0 // pred_fallthru
    _
  // Predicated region
  $region74: #{model_forward.1} parent=0 // pred_check
    _
  $region75: #{model_forward.1} parent=0 // pred_check_branch
    %889 = sbr.rel (0) target = $region77
  $region76: #{model_forward.1} parent=0 // pred_region
    _
  $region77: #{model_forward.1} parent=0 // pred_fallthru
    _

</llo_original>
